<compile_context>
chip_gen: v5e
topology: v5e:2x2
jax: 0.10.0
libtpu: 0.0.40
codegen_flags: <defaults>
</compile_context>

<pallas_src>
import functools

import jax
import jax.numpy as jnp
from jax.experimental import pallas as pl
from jax.experimental.pallas import tpu as pltpu


_LANE = 128
_SUBLANE = 8
_TN_MAX = 512          # output-column tile (multiple of 128)
_TK_MAX = 512          # contraction tile when K-tiling kicks in
_K_RESIDENT_MAX = 2048  # keep full Cin per weight tile up to this size


def _round_up(x, n):
    return ((x + n - 1) // n) * n


def _vmem_capacity_bytes(default=64 * 1024 * 1024):
    """Physical VMEM of the current part (v7x 64 MiB, v5e/v6e 128 MiB)."""
    try:
        info = pltpu.get_tpu_info()
    except Exception:
        return default
    for attr in ("vmem_capacity_bytes", "vmem_bytes", "vmem_size_bytes"):
        cap = getattr(info, attr, None)
        if cap:
            return int(cap)
    return default


def _glu_dims(cin, cout):
    """Static padding / tile choices shared by prepare() and apply()."""
    cout_pad = max(_round_up(cout, _LANE), _LANE)
    tn = _TN_MAX
    while cout_pad % tn:
        tn //= 2
    tn = max(min(tn, cout_pad), _LANE)
    if cin <= _K_RESIDENT_MAX:
        cin_pad, tk = cin, cin          # single K block, no x padding needed
    else:
        tk = _TK_MAX
        cin_pad = _round_up(cin, tk)    # K-tiled; zero-padded rows/cols are inert
    return cin_pad, cout_pad, tk, tn


def _glu_kernel(x_ref, w_ref, b_ref, o_ref, acc_l, acc_r, *, compute_dtype):
    """Grid (i, j, k) = (row tile, column tile, contraction tile)."""
    k = pl.program_id(2)

    @pl.when(k == 0)
    def _init():
        acc_l[...] = jnp.zeros_like(acc_l)
        acc_r[...] = jnp.zeros_like(acc_r)

    # Cast x on the VPU in-kernel (hidden under MXU/DMA) instead of a separate
    # wrapper-side XLA cast that would add a full extra HBM pass.
    x = x_ref[...].astype(compute_dtype)

    # Two MXU matmuls on the paired (left, right) weight tiles, f32 accumulate.
    acc_l[...] += jnp.dot(x, w_ref[0], preferred_element_type=jnp.float32)
    acc_r[...] += jnp.dot(x, w_ref[1], preferred_element_type=jnp.float32)

    @pl.when(k == pl.num_programs(2) - 1)
    def _finalize():
        left = acc_l[...] + b_ref[0]          # f32 bias / gate math
        right = acc_r[...] + b_ref[1]
        o_ref[...] = (left * jax.nn.sigmoid(right)).astype(o_ref.dtype)


def glu_prepare_params(w_left, b_left, w_right, b_right, *,
                       compute_dtype=jnp.bfloat16):
    """One-time weight prep (hoist out of the hot path in real use).

    Takes PyTorch nn.Linear layout (w: [Cout, Cin], b: [Cout]) and returns
      w_fused: [2, Cin_pad, Cout_pad] in compute_dtype (bf16 by default),
      b_fused: [2, 1, Cout_pad]      in float32,
      cout:    original output width (for the final slice).
    """
    cout, cin = w_left.shape
    cin_pad, cout_pad, _, _ = _glu_dims(cin, cout)

    def prep_w(w):
        wt = jnp.transpose(w).astype(compute_dtype)                 # [Cin, Cout]
        return jnp.pad(wt, ((0, cin_pad - cin), (0, cout_pad - cout)))

    def prep_b(b):
        bp = jnp.pad(b.astype(jnp.float32), (0, cout_pad - cout))
        return bp.reshape(1, cout_pad)

    w_fused = jnp.stack([prep_w(w_left), prep_w(w_right)], axis=0)
    b_fused = jnp.stack([prep_b(b_left), prep_b(b_right)], axis=0)
    return w_fused, b_fused, cout


def glu_pallas_apply(x, w_fused, b_fused, cout, *,
                     tm=None, out_dtype=None, return_padded=False):
    """x: [..., Cin]; (w_fused, b_fused, cout) from glu_prepare_params."""
    *lead, cin = x.shape
    m = 1
    for d in lead:
        m *= d
    m = max(m, 1)

    compute_dtype = w_fused.dtype
    out_dtype = out_dtype if out_dtype is not None else x.dtype

    cin_pad, cout_pad, tk, tn = _glu_dims(cin, cout)
    assert w_fused.shape == (2, cin_pad, cout_pad), (w_fused.shape, cin_pad, cout_pad)
    assert b_fused.shape == (2, 1, cout_pad)

    grid_n = cout_pad // tn
    grid_k = cin_pad // tk

    x2d = x.reshape(m, cin)
    if cin_pad != cin:
        # Only when K-tiling very large Cin: zero cols meet zero weight rows.
        x2d = jnp.pad(x2d, ((0, 0), (0, cin_pad - cin)))

    x_bytes = x2d.dtype.itemsize
    w_bytes = jnp.dtype(compute_dtype).itemsize
    out_bytes = jnp.dtype(out_dtype).itemsize

    # Generation-aware VMEM budget (48 MiB on v7x's 64 MiB, 96 MiB on v5e/v6e).
    vmem_cap = _vmem_capacity_bytes()
    vmem_budget = int(min(max(vmem_cap * 3 // 4, 32 * 1024 * 1024),
                          112 * 1024 * 1024))

    # Row-tile default: bigger on 128 MiB-VMEM parts (mem-bound small layers),
    # more conservative on v7x.
    if tm is None:
        tm = 512 if vmem_cap <= 64 * 1024 * 1024 else 1024
    tm = min(tm, _round_up(m, _SUBLANE))
    tm = max(_round_up(tm, _SUBLANE), _SUBLANE)

    def est(tm_):
        x_tile = tm_ * tk * x_bytes
        w_tile = 2 * tk * tn * w_bytes
        b_tile = 2 * tn * 4
        o_tile = tm_ * tn * out_bytes
        acc = 2 * tm_ * tn * 4              # f32 accumulator pair (scratch)
        tmp = 3 * tm_ * tn * 4              # finalize temporaries (left/right/sigmoid)
        # TODO(synk): single-buffer the constant-index weight/bias blocks
        # (pl.Buffered(1)) once pipeline_mode is honored here; budget 2x for now.
        return 2 * (x_tile + w_tile + b_tile + o_tile) + acc + tmp

    while tm > _SUBLANE and est(tm) > vmem_budget:
        tm = max(_SUBLANE, _round_up(tm // 2, _SUBLANE))

    # Keep both v7x TensorCores busy: medium/large M gets >= 2 row tiles.
    if m >= 1024 and pl.cdiv(m, tm) < 2:
        tm = _round_up(pl.cdiv(m, 2), _SUBLANE)

    grid_m = pl.cdiv(m, tm)

    cost = pl.CostEstimate(
        flops=2 * m * cin_pad * 2 * cout_pad,
        transcendentals=2 * m * cout_pad,          # sigmoid ~ exp + reciprocal
        bytes_accessed=(grid_n * m * cin_pad * x_bytes
                        + grid_m * 2 * cin_pad * cout_pad * w_bytes
                        + 2 * cout_pad * 4
                        + m * cout_pad * out_bytes),
    )

    out = pl.pallas_call(
        functools.partial(_glu_kernel, compute_dtype=compute_dtype),
        out_shape=jax.ShapeDtypeStruct((m, cout_pad), out_dtype),
        grid=(grid_m, grid_n, grid_k),
        in_specs=[
            # x row/contraction tile (pipelined).
            pl.BlockSpec((tm, tk), lambda i, j, k: (i, k)),
            # paired (left,right) weight column tile.
            pl.BlockSpec((2, tk, tn), lambda i, j, k: (0, k, j)),
            # paired bias column tile (f32).
            pl.BlockSpec((2, 1, tn), lambda i, j, k: (0, 0, j)),
        ],
        out_specs=pl.BlockSpec((tm, tn), lambda i, j, k: (i, j)),
        scratch_shapes=[pltpu.VMEM((tm, tn), jnp.float32),
                        pltpu.VMEM((tm, tn), jnp.float32)],
        compiler_params=pltpu.CompilerParams(
            dimension_semantics=("parallel", "parallel", "arbitrary"),
            vmem_limit_bytes=vmem_budget,
        ),
        cost_estimate=cost,
    )(x2d, w_fused, b_fused)

    if return_padded:
        # Lane-dense padded result; let a fusion-aware consumer slice lazily.
        return out.reshape(*lead, cout_pad)
    return out[:, :cout].reshape(*lead, cout)


def glu_pallas(x, w_left, b_left, w_right, b_right, *,
               compute_dtype=jnp.bfloat16, tm=None):
    """Convenience wrapper matching the PyTorch module signature.

    In real use call glu_prepare_params() once per layer and reuse its outputs.
    """
    w_fused, b_fused, cout = glu_prepare_params(
        w_left, b_left, w_right, b_right, compute_dtype=compute_dtype)
    return glu_pallas_apply(x, w_fused, b_fused, cout, tm=tm)


if __name__ == "__main__":
    key = jax.random.PRNGKey(0)
    k_x, k_wl, k_bl, k_wr, k_br = jax.random.split(key, 5)

    batch, seq, input_channel, output_channel = 2, 8, 32, 32

    x = jax.random.normal(k_x, (batch, seq, input_channel), dtype=jnp.float32)
    # Deterministic "nn.Linear"-shaped params: weight [out, in], bias [out].
    bound = 1.0 / (input_channel ** 0.5)
    w_left = jax.random.uniform(k_wl, (output_channel, input_channel),
                                minval=-bound, maxval=bound, dtype=jnp.float32)
    b_left = jax.random.uniform(k_bl, (output_channel,),
                                minval=-bound, maxval=bound, dtype=jnp.float32)
    w_right = jax.random.uniform(k_wr, (output_channel, input_channel),
                                 minval=-bound, maxval=bound, dtype=jnp.float32)
    b_right = jax.random.uniform(k_br, (output_channel,),
                                 minval=-bound, maxval=bound, dtype=jnp.float32)

    # Reference in plain JAX (same math as the PyTorch forward).
    ref_left = x @ w_left.T + b_left
    ref_right = x @ w_right.T + b_right
    ref = ref_left * jax.nn.sigmoid(ref_right)

    # Default fast path: bf16 MXU operands, f32 accumulation / gate math.
    out_bf16 = glu_pallas(x, w_left, b_left, w_right, b_right)
    jax.block_until_ready(out_bf16)
    assert out_bf16.shape == (batch, seq, output_channel)
    assert jnp.allclose(out_bf16, ref, atol=5e-2, rtol=5e-2)

    # f32-operand path for a tight numerical check.
    out_f32 = glu_pallas(x, w_left, b_left, w_right, b_right,
                         compute_dtype=jnp.float32)
    jax.block_until_ready(out_f32)
    assert out_f32.shape == (batch, seq, output_channel)
    assert jnp.allclose(out_f32, ref, atol=1e-5, rtol=1e-5)

    print("KERNEL_OK")
</pallas_src>

<mosaic_0001>
module attributes {stable_mosaic.version = 11 : i64} {
  func.func @_glu_kernel(%arg0: i32, %arg1: i32, %arg2: i32, %arg3: memref<16x32xf32, #tpu.memory_space<vmem>>, %arg4: memref<2x32x128xbf16, #tpu.memory_space<vmem>>, %arg5: memref<2x1x128xf32, #tpu.memory_space<vmem>>, %arg6: memref<16x128xf32, #tpu.memory_space<vmem>>, %arg7: memref<16x128xf32, #tpu.memory_space<vmem>>, %arg8: memref<16x128xf32, #tpu.memory_space<vmem>>) attributes {dimension_semantics = [#tpu.dimension_semantics<parallel>, #tpu.dimension_semantics<parallel>, #tpu.dimension_semantics<arbitrary>], iteration_bounds = array<i64: 1, 1, 1>, scalar_prefetch = 0 : i64, scratch_operands = 2 : i64, tpu.core_type = #tpu.core_type<tc>, window_params = [{transform_indices = @transform_0, window_bounds = array<i64: 16, 32>}, {transform_indices = @transform_1, window_bounds = array<i64: 2, 32, 128>}, {transform_indices = @transform_2, window_bounds = array<i64: 2, 1, 128>}, {transform_indices = @transform_3, window_bounds = array<i64: 16, 128>}]} {
    %c0_i32 = arith.constant 0 : i32
    %0 = arith.cmpi eq, %arg2, %c0_i32 : i32
    %1 = arith.extui %0 : i1 to i32
    %c0_i32_0 = arith.constant 0 : i32
    %2 = arith.cmpi ne, %1, %c0_i32_0 : i32
    scf.if %2 {
      %cst_18 = arith.constant 0.000000e+00 : f32
      %20 = vector.broadcast %cst_18 : f32 to vector<16x128xf32>
      %c0_19 = arith.constant 0 : index
      %c0_20 = arith.constant 0 : index
      %21 = vector.load %arg7[%c0_19, %c0_20] : memref<16x128xf32, #tpu.memory_space<vmem>>, vector<16x128xf32>
      tpu.vector_store %arg7[%c0_19, %c0_20], %20 {strides = array<i32>} : memref<16x128xf32, #tpu.memory_space<vmem>>, vector<16x128xf32>,
      %cst_21 = arith.constant 0.000000e+00 : f32
      %22 = vector.broadcast %cst_21 : f32 to vector<16x128xf32>
      %c0_22 = arith.constant 0 : index
      %c0_23 = arith.constant 0 : index
      %23 = vector.load %arg8[%c0_22, %c0_23] : memref<16x128xf32, #tpu.memory_space<vmem>>, vector<16x128xf32>
      tpu.vector_store %arg8[%c0_22, %c0_23], %22 {strides = array<i32>} : memref<16x128xf32, #tpu.memory_space<vmem>>, vector<16x128xf32>,
    } else {
    }
    %c0 = arith.constant 0 : index
    %c0_1 = arith.constant 0 : index
    %3 = vector.load %arg3[%c0, %c0_1] : memref<16x32xf32, #tpu.memory_space<vmem>>, vector<16x32xf32>
    %4 = arith.truncf %3 : vector<16x32xf32> to vector<16x32xbf16>
    %c0_2 = arith.constant 0 : index
    %c0_3 = arith.constant 0 : index
    %5 = vector.load %arg7[%c0_2, %c0_3] : memref<16x128xf32, #tpu.memory_space<vmem>>, vector<16x128xf32>
    %c0_4 = arith.constant 0 : index
    %c0_5 = arith.constant 0 : index
    %c0_6 = arith.constant 0 : index
    %6 = vector.load %arg4[%c0_4, %c0_5, %c0_6] : memref<2x32x128xbf16, #tpu.memory_space<vmem>>, vector<1x32x128xbf16>
    %7 = vector.shape_cast %6 : vector<1x32x128xbf16> to vector<32x128xbf16>
    %cst = arith.constant dense<0.000000e+00> : vector<16x128xf32>
    %8 = tpu.matmul %4, %7, %cst {dimension_numbers = #tpu.dot_dimension_numbers<[1], [0], [0], [1], [0, 0, 1, 1], [], []>} : vector<16x32xbf16>, vector<32x128xbf16>, vector<16x128xf32> -> vector<16x128xf32>
    %9 = arith.addf %5, %8 : vector<16x128xf32>
    %c0_7 = arith.constant 0 : index
    %c0_8 = arith.constant 0 : index
    %10 = vector.load %arg7[%c0_7, %c0_8] : memref<16x128xf32, #tpu.memory_space<vmem>>, vector<16x128xf32>
    tpu.vector_store %arg7[%c0_7, %c0_8], %9 {strides = array<i32>} : memref<16x128xf32, #tpu.memory_space<vmem>>, vector<16x128xf32>,
    %c0_9 = arith.constant 0 : index
    %c0_10 = arith.constant 0 : index
    %11 = vector.load %arg8[%c0_9, %c0_10] : memref<16x128xf32, #tpu.memory_space<vmem>>, vector<16x128xf32>
    %c1 = arith.constant 1 : index
    %c0_11 = arith.constant 0 : index
    %c0_12 = arith.constant 0 : index
    %12 = vector.load %arg4[%c1, %c0_11, %c0_12] : memref<2x32x128xbf16, #tpu.memory_space<vmem>>, vector<1x32x128xbf16>
    %13 = vector.shape_cast %12 : vector<1x32x128xbf16> to vector<32x128xbf16>
    %cst_13 = arith.constant dense<0.000000e+00> : vector<16x128xf32>
    %14 = tpu.matmul %4, %13, %cst_13 {dimension_numbers = #tpu.dot_dimension_numbers<[1], [0], [0], [1], [0, 0, 1, 1], [], []>} : vector<16x32xbf16>, vector<32x128xbf16>, vector<16x128xf32> -> vector<16x128xf32>
    %15 = arith.addf %11, %14 : vector<16x128xf32>
    %c0_14 = arith.constant 0 : index
    %c0_15 = arith.constant 0 : index
    %16 = vector.load %arg8[%c0_14, %c0_15] : memref<16x128xf32, #tpu.memory_space<vmem>>, vector<16x128xf32>
    tpu.vector_store %arg8[%c0_14, %c0_15], %15 {strides = array<i32>} : memref<16x128xf32, #tpu.memory_space<vmem>>, vector<16x128xf32>,
    %c0_i32_16 = arith.constant 0 : i32
    %17 = arith.cmpi eq, %arg2, %c0_i32_16 : i32
    %18 = arith.extui %17 : i1 to i32
    %c0_i32_17 = arith.constant 0 : i32
    %19 = arith.cmpi ne, %18, %c0_i32_17 : i32
    scf.if %19 {
      %c0_18 = arith.constant 0 : index
      %c0_19 = arith.constant 0 : index
      %20 = vector.load %arg7[%c0_18, %c0_19] : memref<16x128xf32, #tpu.memory_space<vmem>>, vector<16x128xf32>
      %c0_20 = arith.constant 0 : index
      %c0_21 = arith.constant 0 : index
      %c0_22 = arith.constant 0 : index
      %21 = vector.load %arg5[%c0_20, %c0_21, %c0_22] : memref<2x1x128xf32, #tpu.memory_space<vmem>>, vector<1x1x128xf32>
      %22 = vector.shape_cast %21 : vector<1x1x128xf32> to vector<1x128xf32>
      %23 = vector.broadcast %22 : vector<1x128xf32> to vector<16x128xf32>
      %24 = arith.addf %20, %23 : vector<16x128xf32>
      %c0_23 = arith.constant 0 : index
      %c0_24 = arith.constant 0 : index
      %25 = vector.load %arg8[%c0_23, %c0_24] : memref<16x128xf32, #tpu.memory_space<vmem>>, vector<16x128xf32>
      %c1_25 = arith.constant 1 : index
      %c0_26 = arith.constant 0 : index
      %c0_27 = arith.constant 0 : index
      %26 = vector.load %arg5[%c1_25, %c0_26, %c0_27] : memref<2x1x128xf32, #tpu.memory_space<vmem>>, vector<1x1x128xf32>
      %27 = vector.shape_cast %26 : vector<1x1x128xf32> to vector<1x128xf32>
      %28 = vector.broadcast %27 : vector<1x128xf32> to vector<16x128xf32>
      %29 = arith.addf %25, %28 : vector<16x128xf32>
      %30 = arith.negf %29 : vector<16x128xf32>
      %31 = math.exp %30 : vector<16x128xf32>
      %cst_28 = arith.constant 1.000000e+00 : f32
      %32 = vector.broadcast %cst_28 : f32 to vector<16x128xf32>
      %33 = arith.addf %32, %31 : vector<16x128xf32>
      %34 = arith.divf %32, %33 : vector<16x128xf32>
      %35 = arith.mulf %24, %34 : vector<16x128xf32>
      %c0_29 = arith.constant 0 : index
      %c0_30 = arith.constant 0 : index
      %36 = vector.load %arg6[%c0_29, %c0_30] : memref<16x128xf32, #tpu.memory_space<vmem>>, vector<16x128xf32>
      tpu.vector_store %arg6[%c0_29, %c0_30], %35 {strides = array<i32>} : memref<16x128xf32, #tpu.memory_space<vmem>>, vector<16x128xf32>,
    } else {
    }
    return
  }
  func.func @transform_0(%arg0: i32, %arg1: i32, %arg2: i32) -> (i32, i32) {
    %c0_i32 = arith.constant 0 : i32
    return %arg0, %arg2 : i32, i32
  }
  func.func @transform_1(%arg0: i32, %arg1: i32, %arg2: i32) -> (i32, i32, i32) {
    %c0_i32 = arith.constant 0 : i32
    %c0_i32_0 = arith.constant 0 : i32
    return %c0_i32, %arg2, %arg1 : i32, i32, i32
  }
  func.func @transform_2(%arg0: i32, %arg1: i32, %arg2: i32) -> (i32, i32, i32) {
    %c0_i32 = arith.constant 0 : i32
    %c0_i32_0 = arith.constant 0 : i32
    %c0_i32_1 = arith.constant 0 : i32
    return %c0_i32, %c0_i32_0, %arg1 : i32, i32, i32
  }
  func.func @transform_3(%arg0: i32, %arg1: i32, %arg2: i32) -> (i32, i32) {
    %c0_i32 = arith.constant 0 : i32
    return %arg0, %arg1 : i32, i32
  }
}

</mosaic_0001>

<llo_original>
// kernel: tpu_custom_call.1
$region0: #{tpu_custom_call.1}
  #allocation0 [shape = 'u32[]', space=smem, size = 0x4, offset = 0x4, fixed_abs, tag = 'smem constant byte address 0x4 - core index']
  #allocation1 [shape = 'u32[72,128]{1,0:T(1,128)}', space=vmem, size = 0x9000, scoped, tag = 'internal scratch']
  #allocation2 [shape = 'f32[16,128]{1,0:T(8,128)}', space=vmem, size = 0x2000, scoped, tag = 'scratch operand']
  #allocation3 [shape = 'f32[16,128]{1,0:T(8,128)}', space=vmem, size = 0x2000, scoped, tag = 'scratch operand']
  %s0 = inlined_call_operand.hbm [shape: f32[16,32], index: 0, kind: input, shape index: {}]
  %s1 = inlined_call_operand.hbm [shape: bf16[2,32,128], index: 1, kind: input, shape index: {}]
  %s2 = inlined_call_operand.hbm [shape: f32[2,1,128], index: 2, kind: input, shape index: {}]
  %s3 = inlined_call_operand.hbm [shape: f32[16,128], index: 3, kind: output, shape index: {}]
  %s4 = sld [smem:[#allocation0]]
  $region42: #{tpu_custom_call.1} parent=0
    _
  %s6 = ssub.s32 1, %s4
  %s7 = scalar_select 0, %s6, %s4
  $region1: #{tpu_custom_call.1} parent=0
    #allocation4 [shape = 'u8[8192]{0}', space=vmem, size = 0x2000, scoped, tag = 'input window, operand 0, single buffered']
    #allocation5 [shape = 's32[1]{0}', space=sflag, size = 0x4, scoped, tag = 'scoped memory for tpu_custom_call.1']
    #allocation6 [shape = 's32[1]{0}', space=sflag, size = 0x4, scoped, tag = 'scoped memory for tpu_custom_call.1']
    #allocation7 [shape = 'u8[16384]{0}', space=vmem, size = 0x4000, scoped, tag = 'input window, operand 1, single buffered']
    #allocation8 [shape = 's32[1]{0}', space=sflag, size = 0x4, scoped, tag = 'scoped memory for tpu_custom_call.1']
    #allocation9 [shape = 'u8[1024]{0}', space=vmem, size = 0x400, scoped, tag = 'input window, operand 2, single buffered']
    #allocation10 [shape = 'u8[8192]{0}', space=vmem, size = 0x2000, scoped, tag = 'output window, operand 0, single buffered']
    %8 = vsyncpa [#allocation5], 0
    %9 = vsyncpa [#allocation8], 0
    %10 = vsyncpa [#allocation6], 0
    // Predicated region
    $region2: #{tpu_custom_call.1} parent=1 // pred_check
      _
    $region3: #{tpu_custom_call.1} parent=1 // pred_check_branch
      %12 = sbr.rel (0) target = $region5
    $region4: #{tpu_custom_call.1} parent=1 // pred_region
      %14 = vsyncadd [#allocation5], 0
      %s15 = sshll.u32 %s0, 4
      %s16 = int_to_ptr.hbm [resolvable:$true] %s15
      %s17 = sshll.u32 [#allocation4], 4
      %s18 = int_to_ptr.vmem [resolvable:$true] %s17
      %23 = dma.hbm_to_vmem [thread:$0]  %s16, 256, %s18, [#allocation5], 128, 128, 8
    $region5: #{tpu_custom_call.1} parent=1 // pred_fallthru
      _
    // Predicated region
    $region6: #{tpu_custom_call.1} parent=1 // pred_check
      _
    $region7: #{tpu_custom_call.1} parent=1 // pred_check_branch
      %25 = sbr.rel (0) target = $region9
    $region8: #{tpu_custom_call.1} parent=1 // pred_region
      %27 = vsyncadd [#allocation8], 0
      %s28 = sshll.u32 %s1, 4
      %s29 = int_to_ptr.hbm [resolvable:$true] %s28
      %s30 = sshll.u32 [#allocation7], 4
      %s31 = int_to_ptr.vmem [resolvable:$true] %s30
      %36 = dma.hbm_to_vmem [thread:$0]  %s29, 512, %s31, [#allocation8], 64, 64, 4
    $region9: #{tpu_custom_call.1} parent=1 // pred_fallthru
      _
    // Predicated region
    $region10: #{tpu_custom_call.1} parent=1 // pred_check
      _
    $region11: #{tpu_custom_call.1} parent=1 // pred_check_branch
      %38 = sbr.rel (0) target = $region13
    $region12: #{tpu_custom_call.1} parent=1 // pred_region
      %40 = vsyncadd [#allocation8], 0
      %s41 = sshll.u32 %s2, 4
      %s42 = int_to_ptr.hbm [resolvable:$true] %s41
      %s43 = sshll.u32 [#allocation9], 4
      %s44 = int_to_ptr.vmem [resolvable:$true] %s43
      %49 = dma.hbm_to_vmem [thread:$0]  %s42, 32, %s44, [#allocation8], 16, 16, 1
    $region13: #{tpu_custom_call.1} parent=1 // pred_fallthru
      _
    // Predicated region
    $region14: #{tpu_custom_call.1} parent=1 // pred_check
      _
    $region15: #{tpu_custom_call.1} parent=1 // pred_check_branch
      %51 = sbr.rel (0) target = $region17
    $region16: #{tpu_custom_call.1} parent=1 // pred_region
      %53 = dma.done [#allocation5], 256
    $region17: #{tpu_custom_call.1} parent=1 // pred_fallthru
      _
    // Predicated region
    $region18: #{tpu_custom_call.1} parent=1 // pred_check
      _
    $region19: #{tpu_custom_call.1} parent=1 // pred_check_branch
      %55 = sbr.rel (0) target = $region21
    $region20: #{tpu_custom_call.1} parent=1 // pred_region
      %57 = dma.done [#allocation8], 512
    $region21: #{tpu_custom_call.1} parent=1 // pred_fallthru
      _
    // Predicated region
    $region22: #{tpu_custom_call.1} parent=1 // pred_check
      _
    $region23: #{tpu_custom_call.1} parent=1 // pred_check_branch
      %59 = sbr.rel (0) target = $region25
    $region24: #{tpu_custom_call.1} parent=1 // pred_region
      %61 = dma.done [#allocation8], 32
    $region25: #{tpu_custom_call.1} parent=1 // pred_fallthru
      _
    %p63 = scmp.eq.s32.totalorder 0, 0
    // Predicated region
    $region26: #{tpu_custom_call.1} parent=1 // pred_check
      %p64 = pneg %p63
    $region27: #{tpu_custom_call.1} parent=1 // pred_check_branch
      %66 = sbr.rel (%p64) target = $region29
    $region28: #{tpu_custom_call.1} parent=1 // pred_region
      %67 = vst [vmem:[#allocation2] sm:$0xff] 0.0
      %68 = vst [vmem:[#allocation2 + $0x8] sm:$0xff] 0.0
      %69 = vst [vmem:[#allocation3] sm:$0xff] 0.0
      %70 = vst [vmem:[#allocation3 + $0x8] sm:$0xff] 0.0
    $region29: #{tpu_custom_call.1} parent=1 // pred_fallthru
      _
    %v71 = vld [vmem:[#allocation4] sm:$0xff]
    %v72 = vld [vmem:[#allocation4 + $0x8] sm:$0xff]
    %v73 = vpack.c.bf16 %v72, %v71
    %v74 = vld [vmem:[#allocation2] sm:$0xff]
    %v75 = vld [vmem:[#allocation2 + $0x8] sm:$0xff]
    %v76 = vld [vmem:[#allocation7] sm:$0xf]
    %v77 = vld [vmem:[#allocation7 + $0x4] sm:$0xf]
    %v78 = vld [vmem:[#allocation7 + $0x8] sm:$0xf]
    %v79 = vld [vmem:[#allocation7 + $0xc] sm:$0xf]
    %v84 = vunpack.c.l.b16 %v76
    %v85 = vunpack.c.l.b16 %v77
    %v86 = vunpack.c.l.b16 %v78
    %v87 = vunpack.c.l.b16 %v79
    %v88 = vpack.c.b16 %v85, %v84
    %v89 = vpack.c.b16 %v87, %v86
    %vm92 = vcmask 261120
    %v94 = vsel %vm92, %v73, 0
    %96 = vmatpush.bf16.msra.mxu0 0
    %97 = vmatpush.bf16.msra.mxu0 0
    %98 = vmatpush.bf16.msra.mxu0 0
    %99 = vmatpush.bf16.msra.mxu0 0
    %100 = vmatpush.bf16.msra.mxu0 0
    %101 = vmatpush.bf16.msra.mxu0 0
    %102 = vmatpush.bf16.msra.mxu0 %v89
    %103 = vmatpush.bf16.msra.mxu0 %v88
    %104 = vmatmul.bf16.gmra.mxu0 %v94
    %v105 = vpop.f32.mrf.mxu0
    %v106 = vadd.f32 0.0, %v105
    %v107 = vpop.f32.mrf.mxu0
    %v108 = vadd.f32 0.0, %v107
    %109 = vdwg.mxu0
    %v110 = vadd.f32 %v74, %v106
    %v111 = vadd.f32 %v75, %v108
    %112 = vst [vmem:[#allocation2] sm:$0xff] %v110
    %113 = vst [vmem:[#allocation2 + $0x8] sm:$0xff] %v111
    %v114 = vld [vmem:[#allocation3] sm:$0xff]
    %v115 = vld [vmem:[#allocation3 + $0x8] sm:$0xff]
    %s116 = scalar_lea.vmem [#allocation7], 16
    %v117 = vld [vmem:[%s116] sm:$0xf]
    %v118 = vld [vmem:[%s116 + $0x4] sm:$0xf]
    %v119 = vld [vmem:[%s116 + $0x8] sm:$0xf]
    %v120 = vld [vmem:[%s116 + $0xc] sm:$0xf]
    %v125 = vunpack.c.l.b16 %v117
    %v126 = vunpack.c.l.b16 %v118
    %v127 = vunpack.c.l.b16 %v119
    %v128 = vunpack.c.l.b16 %v120
    %v129 = vpack.c.b16 %v126, %v125
    %v130 = vpack.c.b16 %v128, %v127
    %133 = vmatpush.bf16.msra.mxu0 0
    %134 = vmatpush.bf16.msra.mxu0 0
    %135 = vmatpush.bf16.msra.mxu0 0
    %136 = vmatpush.bf16.msra.mxu0 0
    %137 = vmatpush.bf16.msra.mxu0 0
    %138 = vmatpush.bf16.msra.mxu0 0
    %139 = vmatpush.bf16.msra.mxu0 %v130
    %140 = vmatpush.bf16.msra.mxu0 %v129
    %141 = vmatmul.bf16.gmra.mxu0 %v94
    %v142 = vpop.f32.mrf.mxu0
    %v143 = vadd.f32 0.0, %v142
    %v144 = vpop.f32.mrf.mxu0
    %v145 = vadd.f32 0.0, %v144
    %146 = vdwg.mxu0
    %v147 = vadd.f32 %v114, %v143
    %v148 = vadd.f32 %v115, %v145
    %149 = vst [vmem:[#allocation3] sm:$0xff] %v147
    %150 = vst [vmem:[#allocation3 + $0x8] sm:$0xff] %v148
    // Predicated region
    $region30: #{tpu_custom_call.1} parent=1 // pred_check
      %p151 = pneg %p63
    $region31: #{tpu_custom_call.1} parent=1 // pred_check_branch
      %153 = sbr.rel (%p151) target = $region33
    $region32: #{tpu_custom_call.1} parent=1 // pred_region
      %v154 = vld [vmem:[#allocation2] sm:$0xff]
      %v155 = vld [vmem:[#allocation2 + $0x8] sm:$0xff]
      %v156 = vld [vmem:[#allocation9] sm:$0x1]
      %v158 = vperm.slane %v156, 0
      %v160 = vadd.f32 %v154, %v158
      %v161 = vadd.f32 %v155, %v158
      %v162 = vld [vmem:[#allocation3] sm:$0xff]
      %v163 = vld [vmem:[#allocation3 + $0x8] sm:$0xff]
      %s164 = scalar_lea.vmem [#allocation9], 1
      %v165 = vld [vmem:[%s164] sm:$0x1]
      %v167 = vperm.slane %v165, 0
      %v169 = vadd.f32 %v162, %v167
      %v170 = vadd.f32 %v163, %v167
      %v171 = vxor.u32 %v169, 2147483648
      %v172 = vxor.u32 %v170, 2147483648
      %v173 = vmul.f32 %v171, 1.442695
      %v174 = vpow.pop %v173
      %v175 = vmul.f32 %v172, 1.442695
      %v176 = vpow.pop %v175
      %v177 = vadd.f32 %v174, 1.0
      %v178 = vadd.f32 %v176, 1.0
      %v179 = vrcp.pop %v177
      %v180 = vmul.f32 %v177, %v179
      %v181 = vsub.f32 1.0, %v180
      %v182 = vmul.f32 %v179, %v181
      %v183 = vadd.f32 %v179, %v182
      %vm184 = vweird.f32 %v177
      %vm185 = vweird.f32 %v179
      %vm186 = vmor %vm184, %vm185
      %v187 = vsel %vm186, %v179, %v183
      %v188 = vand.u32 2147483647, %v177
      %vm189 = vcmp.eq.f32.partialorder %v188, 8.507059e+37
      %v190 = vand.u32 %v177, 2147483648
      %v191 = vor.u32 1.1754944e-38, %v190
      %v192 = vsel %vm189, %v191, %v187
      %v193 = vmul.f32 1.0, %v192
      %v194 = vrcp.pop %v178
      %v195 = vmul.f32 %v178, %v194
      %v196 = vsub.f32 1.0, %v195
      %v197 = vmul.f32 %v194, %v196
      %v198 = vadd.f32 %v194, %v197
      %vm199 = vweird.f32 %v178
      %vm200 = vweird.f32 %v194
      %vm201 = vmor %vm199, %vm200
      %v202 = vsel %vm201, %v194, %v198
      %v203 = vand.u32 2147483647, %v178
      %vm204 = vcmp.eq.f32.partialorder %v203, 8.507059e+37
      %v205 = vand.u32 %v178, 2147483648
      %v206 = vor.u32 1.1754944e-38, %v205
      %v207 = vsel %vm204, %v206, %v202
      %v208 = vmul.f32 1.0, %v207
      %v209 = vmul.f32 %v160, %v193
      %v210 = vmul.f32 %v161, %v208
      %211 = vst [vmem:[#allocation10] sm:$0xff] %v209
      %212 = vst [vmem:[#allocation10 + $0x8] sm:$0xff] %v210
    $region33: #{tpu_custom_call.1} parent=1 // pred_fallthru
      _
    // Predicated region
    $region34: #{tpu_custom_call.1} parent=1 // pred_check
      _
    $region35: #{tpu_custom_call.1} parent=1 // pred_check_branch
      %214 = sbr.rel (0) target = $region37
    $region36: #{tpu_custom_call.1} parent=1 // pred_region
      %216 = vsyncadd [#allocation6], 0
      %s217 = sshll.u32 [#allocation10], 4
      %s218 = int_to_ptr.vmem [resolvable:$true] %s217
      %s219 = sshll.u32 %s3, 4
      %s220 = int_to_ptr.hbm [resolvable:$true] %s219
      %225 = dma.vmem_to_hbm [thread:$0]  %s218, 256, %s220, [#allocation6], 128, 128, 8
    $region37: #{tpu_custom_call.1} parent=1 // pred_fallthru
      _
    // Predicated region
    $region38: #{tpu_custom_call.1} parent=1 // pred_check
      _
    $region39: #{tpu_custom_call.1} parent=1 // pred_check_branch
      %227 = sbr.rel (0) target = $region41
    $region40: #{tpu_custom_call.1} parent=1 // pred_region
      %229 = dma.done [#allocation6], 256
    $region41: #{tpu_custom_call.1} parent=1 // pred_fallthru
      _
    %230 = vsyncpa [#allocation5], 1
    %231 = vsyncpa [#allocation8], 1
    %232 = vsyncpa [#allocation6], 1

</llo_original>
